<compile_context>
chip_gen: v5e
topology: v5e:2x2
jax: 0.10.0
libtpu: 0.0.40
codegen_flags: <defaults>
</compile_context>

<pallas_src>
import functools

import jax
import jax.numpy as jnp
from jax.experimental import pallas as pl
from jax.experimental.pallas import tpu as pltpu


def _round_up(a, b):
    return -(-a // b) * b


def _decomp_kernel(x_ref, res_ref, mean_ref, xpad_ref, *, kernel_size, pad, pad_f):
    """Series decomposition for one (L, Ct) tile.

    x_ref    : (L, Ct)                    time on sublanes, channels on lanes
    res_ref  : (L, Ct)                    residual  = x - moving_mean
    mean_ref : (L, Ct)                    moving_mean (trend)
    xpad_ref : (pad_f + L + pad, Ct) f32  edge-replicated padded series scratch,
                                          pad_f = round_up(pad, 8) for aligned store
    """
    L, Ct = x_ref.shape
    x = x_ref[...].astype(jnp.float32)                     # (L, Ct)

    if kernel_size > 1:
        # rows [pad_f, pad_f+L)        : x           (sublane-aligned bulk store)
        # rows [0, pad_f)              : first step  (aligned broadcast store)
        # rows [pad_f+L, pad_f+L+pad)  : last step   (broadcast store)
        xpad_ref[pad_f:pad_f + L, :] = x
        xpad_ref[0:pad_f, :] = jnp.broadcast_to(x[0:1, :], (pad_f, Ct))
        xpad_ref[pad_f + L:pad_f + L + pad, :] = jnp.broadcast_to(
            x[L - 1:L, :], (pad, Ct))

    # AvgPool1d(kernel_size, stride=1) over the padded series == k-tap sliding sum,
    # accumulated in f32.  The center tap (j == pad) uses the in-register x.
    acc = x
    base = pad_f - pad
    for j in range(kernel_size):
        if j == pad:
            continue
        acc = acc + xpad_ref[base + j:base + j + L, :]
    mean = acc * (1.0 / kernel_size)

    mean_ref[...] = mean.astype(mean_ref.dtype)
    res_ref[...] = (x - mean).astype(res_ref.dtype)


def series_decomp(x, kernel_size, *, col_block=1024):
    """JAX/Pallas equivalent of the PyTorch `series_decomp` module.

    x: (B, L, C) array.  Returns (res, moving_mean), both (B, L, C), dtype of x.
    NOTE: requires an odd kernel_size (same-length output, the Autoformer default);
    PyTorch's even-kernel behavior changes the output length and is not supported.
    """
    B, L, C = x.shape
    assert kernel_size >= 1 and kernel_size % 2 == 1, (
        "series_decomp expects an odd kernel_size")
    pad = (kernel_size - 1) // 2
    pad_f = _round_up(pad, 8)            # aligned front pad inside the VMEM scratch
    itemsize = jnp.dtype(x.dtype).itemsize

    # ---- channel-tile (lane) sizing from a conservative VMEM budget ----
    budget = 24 << 20                    # working-set target (fits v7x's 64 MiB VMEM)
    per_col = (L * (6 * itemsize + 4 * 4)            # 3 dbl-buffered blocks + f32 temps
               + (pad_f + L + pad) * 4)              # padded scratch
    ct_cap = max(128, (budget // max(per_col, 1)) // 128 * 128)
    cb = max(128, (col_block // 128) * 128)
    if C <= min(cb, ct_cap):
        Ct = C                           # full-extent block: legal for any C
    else:
        Ct = min(cb, ct_cap)             # multiple of 128; ragged tail block is fine
    n_ct = pl.cdiv(C, Ct)

    # Give megacore (v7x) at least two tiles to shard when the batch is 1.
    if B == 1 and n_ct == 1 and C > 128:
        Ct = max(128, _round_up(-(-C // 2), 128))
        n_ct = pl.cdiv(C, Ct)

    grid = (B, n_ct)

    kernel = functools.partial(_decomp_kernel, kernel_size=kernel_size,
                               pad=pad, pad_f=pad_f)

    blk = L * Ct * itemsize
    est = 2 * 3 * blk + (pad_f + L + pad) * Ct * 4 + 4 * L * Ct * 4 + (1 << 20)
    vmem_limit = int(min(max(32 << 20, 2 * est), 40 << 20))

    def idx(b, c):
        return (b, 0, c)

    res, mean = pl.pallas_call(
        kernel,
        out_shape=(jax.ShapeDtypeStruct((B, L, C), x.dtype),   # res
                   jax.ShapeDtypeStruct((B, L, C), x.dtype)),  # moving_mean
        grid_spec=pltpu.PrefetchScalarGridSpec(
            num_scalar_prefetch=0,
            grid=grid,
            in_specs=[pl.BlockSpec((pl.Squeezed(), L, Ct), idx)],
            out_specs=[pl.BlockSpec((pl.Squeezed(), L, Ct), idx),
                       pl.BlockSpec((pl.Squeezed(), L, Ct), idx)],
            scratch_shapes=[pltpu.VMEM((pad_f + L + pad, Ct), jnp.float32)],
        ),
        compiler_params=pltpu.CompilerParams(
            dimension_semantics=("parallel", "parallel"),
            vmem_limit_bytes=vmem_limit),
    )(x)
    return res, mean


def _reference(x, kernel_size):
    """Pure-JAX reference mirroring the PyTorch forward exactly."""
    pad = (kernel_size - 1) // 2
    front = jnp.repeat(x[:, 0:1, :], pad, axis=1)
    end = jnp.repeat(x[:, -1:, :], pad, axis=1)
    xp = jnp.concatenate([front, x, end], axis=1)
    L = x.shape[1]
    windows = jnp.stack([xp[:, j:j + L, :] for j in range(kernel_size)], axis=0)
    mean = jnp.mean(windows, axis=0)
    return x - mean, mean


if __name__ == "__main__":
    key = jax.random.PRNGKey(0)
    k1, k2, k3 = jax.random.split(key, 3)

    decomp = jax.jit(series_decomp, static_argnames=("kernel_size", "col_block"))

    # Case 1: tiny module-sized shapes, natural (B, L, C) layout, grid (2, 1).
    B, L, C, ks = 2, 16, 8, 5
    x = jax.random.normal(k1, (B, L, C), dtype=jnp.float32)
    res, mean = decomp(x, kernel_size=ks)
    jax.block_until_ready((res, mean))
    r_ref, m_ref = _reference(x, ks)
    assert jnp.allclose(res, r_ref, atol=1e-5), "residual mismatch (case 1)"
    assert jnp.allclose(mean, m_ref, atol=1e-5), "moving_mean mismatch (case 1)"

    # Case 2: lane-dense channel tiles with a ragged tail block (C=192, Ct=128 -> grid (2, 2)).
    B2, L2, C2, ks2 = 2, 24, 192, 7
    x2 = jax.random.normal(k2, (B2, L2, C2), dtype=jnp.float32)
    res2, mean2 = decomp(x2, kernel_size=ks2, col_block=128)
    jax.block_until_ready((res2, mean2))
    r2_ref, m2_ref = _reference(x2, ks2)
    assert jnp.allclose(res2, r2_ref, atol=1e-5), "residual mismatch (case 2)"
    assert jnp.allclose(mean2, m2_ref, atol=1e-5), "moving_mean mismatch (case 2)"

    # Case 3: large kernel relative to the sequence (pad >= L).
    B3, L3, C3, ks3 = 2, 8, 4, 25
    x3 = jax.random.normal(k3, (B3, L3, C3), dtype=jnp.float32)
    res3, mean3 = decomp(x3, kernel_size=ks3)
    jax.block_until_ready((res3, mean3))
    r3_ref, m3_ref = _reference(x3, ks3)
    assert jnp.allclose(res3, r3_ref, atol=1e-5), "residual mismatch (case 3)"
    assert jnp.allclose(mean3, m3_ref, atol=1e-5), "moving_mean mismatch (case 3)"

    print("KERNEL_OK")
</pallas_src>

<mosaic_0001>
module attributes {stable_mosaic.version = 11 : i64} {
  func.func @_decomp_kernel(%arg0: i32, %arg1: i32, %arg2: memref<1x16x8xf32, #tpu.memory_space<vmem>>, %arg3: memref<1x16x8xf32, #tpu.memory_space<vmem>>, %arg4: memref<1x16x8xf32, #tpu.memory_space<vmem>>, %arg5: memref<26x8xf32, #tpu.memory_space<vmem>>) attributes {dimension_semantics = [#tpu.dimension_semantics<parallel>, #tpu.dimension_semantics<parallel>], iteration_bounds = array<i64: 2, 1>, scalar_prefetch = 0 : i64, scratch_operands = 1 : i64, tpu.core_type = #tpu.core_type<tc>, window_params = [{transform_indices = @transform_0, window_bounds = array<i64: 1, 16, 8>}, {transform_indices = @transform_1, window_bounds = array<i64: 1, 16, 8>}, {transform_indices = @transform_2, window_bounds = array<i64: 1, 16, 8>}]} {
    %c0 = arith.constant 0 : index
    %c0_0 = arith.constant 0 : index
    %c0_1 = arith.constant 0 : index
    %0 = vector.load %arg2[%c0, %c0_0, %c0_1] : memref<1x16x8xf32, #tpu.memory_space<vmem>>, vector<1x16x8xf32>
    %1 = vector.shape_cast %0 : vector<1x16x8xf32> to vector<16x8xf32>
    %c8 = arith.constant 8 : index
    %c0_2 = arith.constant 0 : index
    %2 = vector.load %arg5[%c8, %c0_2] : memref<26x8xf32, #tpu.memory_space<vmem>>, vector<16x8xf32>
    tpu.vector_store %arg5[%c8, %c0_2], %1 {strides = array<i32>} : memref<26x8xf32, #tpu.memory_space<vmem>>, vector<16x8xf32>,
    %3 = vector.extract_strided_slice %1 {offsets = [0, 0], sizes = [1, 8], strides = [1, 1]} : vector<16x8xf32> to vector<1x8xf32>
    %4 = vector.shape_cast %3 : vector<1x8xf32> to vector<1x8xf32>
    %5 = vector.broadcast %4 : vector<1x8xf32> to vector<8x8xf32>
    %c0_3 = arith.constant 0 : index
    %c0_4 = arith.constant 0 : index
    %6 = vector.load %arg5[%c0_3, %c0_4] : memref<26x8xf32, #tpu.memory_space<vmem>>, vector<8x8xf32>
    tpu.vector_store %arg5[%c0_3, %c0_4], %5 {strides = array<i32>} : memref<26x8xf32, #tpu.memory_space<vmem>>, vector<8x8xf32>,
    %7 = vector.extract_strided_slice %1 {offsets = [15, 0], sizes = [1, 8], strides = [1, 1]} : vector<16x8xf32> to vector<1x8xf32>
    %8 = vector.shape_cast %7 : vector<1x8xf32> to vector<1x8xf32>
    %9 = vector.broadcast %8 : vector<1x8xf32> to vector<2x8xf32>
    %c24 = arith.constant 24 : index
    %c0_5 = arith.constant 0 : index
    %10 = vector.load %arg5[%c24, %c0_5] : memref<26x8xf32, #tpu.memory_space<vmem>>, vector<2x8xf32>
    tpu.vector_store %arg5[%c24, %c0_5], %9 {strides = array<i32>} : memref<26x8xf32, #tpu.memory_space<vmem>>, vector<2x8xf32>,
    %c6 = arith.constant 6 : index
    %c0_6 = arith.constant 0 : index
    %11 = vector.load %arg5[%c6, %c0_6] : memref<26x8xf32, #tpu.memory_space<vmem>>, vector<16x8xf32>
    %12 = arith.addf %1, %11 : vector<16x8xf32>
    %c7 = arith.constant 7 : index
    %c0_7 = arith.constant 0 : index
    %13 = vector.load %arg5[%c7, %c0_7] : memref<26x8xf32, #tpu.memory_space<vmem>>, vector<16x8xf32>
    %14 = arith.addf %12, %13 : vector<16x8xf32>
    %c9 = arith.constant 9 : index
    %c0_8 = arith.constant 0 : index
    %15 = vector.load %arg5[%c9, %c0_8] : memref<26x8xf32, #tpu.memory_space<vmem>>, vector<16x8xf32>
    %16 = arith.addf %14, %15 : vector<16x8xf32>
    %c10 = arith.constant 10 : index
    %c0_9 = arith.constant 0 : index
    %17 = vector.load %arg5[%c10, %c0_9] : memref<26x8xf32, #tpu.memory_space<vmem>>, vector<16x8xf32>
    %18 = arith.addf %16, %17 : vector<16x8xf32>
    %cst = arith.constant 2.000000e-01 : f32
    %19 = vector.broadcast %cst : f32 to vector<16x8xf32>
    %20 = arith.mulf %18, %19 : vector<16x8xf32>
    %c0_10 = arith.constant 0 : index
    %c0_11 = arith.constant 0 : index
    %c0_12 = arith.constant 0 : index
    %21 = vector.load %arg4[%c0_10, %c0_11, %c0_12] : memref<1x16x8xf32, #tpu.memory_space<vmem>>, vector<1x16x8xf32>
    %22 = vector.shape_cast %21 : vector<1x16x8xf32> to vector<16x8xf32>
    %23 = vector.shape_cast %20 : vector<16x8xf32> to vector<1x16x8xf32>
    tpu.vector_store %arg4[%c0_10, %c0_11, %c0_12], %23 {strides = array<i32>} : memref<1x16x8xf32, #tpu.memory_space<vmem>>, vector<1x16x8xf32>,
    %24 = arith.subf %1, %20 : vector<16x8xf32>
    %c0_13 = arith.constant 0 : index
    %c0_14 = arith.constant 0 : index
    %c0_15 = arith.constant 0 : index
    %25 = vector.load %arg3[%c0_13, %c0_14, %c0_15] : memref<1x16x8xf32, #tpu.memory_space<vmem>>, vector<1x16x8xf32>
    %26 = vector.shape_cast %25 : vector<1x16x8xf32> to vector<16x8xf32>
    %27 = vector.shape_cast %24 : vector<16x8xf32> to vector<1x16x8xf32>
    tpu.vector_store %arg3[%c0_13, %c0_14, %c0_15], %27 {strides = array<i32>} : memref<1x16x8xf32, #tpu.memory_space<vmem>>, vector<1x16x8xf32>,
    return
  }
  func.func @transform_0(%arg0: i32, %arg1: i32) -> (i32, i32, i32) {
    %c0_i32 = arith.constant 0 : i32
    %c0_i32_0 = arith.constant 0 : i32
    return %arg0, %c0_i32, %arg1 : i32, i32, i32
  }
  func.func @transform_1(%arg0: i32, %arg1: i32) -> (i32, i32, i32) {
    %c0_i32 = arith.constant 0 : i32
    %c0_i32_0 = arith.constant 0 : i32
    return %arg0, %c0_i32, %arg1 : i32, i32, i32
  }
  func.func @transform_2(%arg0: i32, %arg1: i32) -> (i32, i32, i32) {
    %c0_i32 = arith.constant 0 : i32
    %c0_i32_0 = arith.constant 0 : i32
    return %arg0, %c0_i32, %arg1 : i32, i32, i32
  }
}

</mosaic_0001>

<llo_original>
// kernel: series_decomp.1
$region0: #{series_decomp.1}
  #allocation0 [shape = 'u32[]', space=smem, size = 0x4, offset = 0x4, fixed_abs, tag = 'smem constant byte address 0x4 - core index']
  #allocation1 [shape = 'u32[72,128]{1,0:T(1,128)}', space=vmem, size = 0x9000, scoped, tag = 'internal scratch']
  #allocation2 [shape = 'f32[26,8]{1,0:T(8,128)}', space=vmem, size = 0x4000, scoped, tag = 'scratch operand']
  %s0 = inlined_call_operand.vmem [shape: f32[2,16,8], index: 0, kind: input, shape index: {}]
  %s1 = inlined_call_operand.vmem [shape: f32[2,16,8], index: 1, kind: output, shape index: {0}]
  %s2 = inlined_call_operand.vmem [shape: f32[2,16,8], index: 2, kind: output, shape index: {1}]
  %3 = xla_tuple %s1, %s2
  %s4 = sld [smem:[#allocation0]]
  $region45: #{series_decomp.1} parent=0
    _
  %s6 = ssub.s32 1, %s4
  %s7 = scalar_select 0, %s6, %s4
  loop: start=0, step=1, limit=4
  $region2: #{series_decomp.1} parent=0 // loop_pre_header
    _
  $region3: #{series_decomp.1} parent=0 // loop_header
    %s9 = sphi 0, %s13
    %p10 = scmp.ge.s32.totalorder %s9, 4
    %s16 = sphi 0, %s28
    %s17 = sphi 0, %s24
    %s18 = sphi 0, %s16
    %s19 = sphi 0, %s17
    %s20 = sphi 0, %s18
    %s21 = sphi 0, %s19
    %s33 = sphi 0, %s35
    %s36 = sphi 0, %s33
    %s37 = sphi 0, %s36
    %s53 = sphi 0, %s37
    %s61 = sphi 0, %s63
    %s64 = sphi 0, %s61
    %s65 = sphi 0, %s64
    %s81 = sphi 0, %s65
    %s89 = sphi 0, %s91
    %s92 = sphi 0, %s89
    %s93 = sphi 0, %s92
    %s109 = sphi 0, %s93
  $region4: #{series_decomp.1} parent=0 // loop_header_branch
    %12 = sbr.rel (%p10) target = $region8
  $region5: #{series_decomp.1} parent=0 // loop_body
    %s14 = ssub.s32 %s9, 1
    %s15 = ssub.s32 %s9, 2
    %s22 = sadd.s32 1, %s17
    %p23 = scmp.ge.s32.totalorder %s22, 1
    %s24 = scalar_select %p23, 0, %s22
    %s25 = sadd.s32 1, %s16
    %s26 = scalar_select %p23, %s25, %s16
    %p27 = scmp.ge.s32.totalorder %s26, 2
    %s28 = scalar_select %p27, 0, %s26
    %s29 = ssub.s32 %s16, %s28
    %s30 = ssub.s32 %s17, %s24
    %s31 = sor.u32 %s29, %s30
    %p32 = scmp.eq.s32.totalorder %s31, 0
    %s34 = sadd.s32 %s33, 1
    %s35 = scalar_select %p32, %s33, %s34
    %p38 = pneg %p32
    %p39 = scmp.eq.s32.totalorder %s9, 1
    %p40 = por %p38, %p39
    %p41 = scmp.ne.s32.totalorder %s33, %s36
    %p42 = scmp.eq.s32.totalorder %s9, 0
    %p43 = por %p41, %p42
    %p44 = scmp.ne.s32.totalorder %s33, %s36
    %p45 = scmp.eq.s32.totalorder %s14, 1
    %p46 = por %p44, %p45
    %p47 = scmp.ne.s32.totalorder %s36, %s37
    %p48 = scmp.eq.s32.totalorder %s14, 0
    %p49 = por %p47, %p48
    %p50 = scmp.ne.s32.totalorder %s36, %s37
    %p51 = scmp.eq.s32.totalorder %s15, 1
    %p52 = por %p50, %p51
    %p54 = scmp.ne.s32.totalorder %s37, %s53
    %p55 = scmp.eq.s32.totalorder %s15, 0
    %p56 = por %p54, %p55
    %s57 = ssub.s32 %s16, %s28
    %s58 = ssub.s32 %s17, %s24
    %s59 = sor.u32 %s57, %s58
    %p60 = scmp.eq.s32.totalorder %s59, 0
    %s62 = sadd.s32 %s61, 1
    %s63 = scalar_select %p60, %s61, %s62
    %p66 = pneg %p60
    %p67 = scmp.eq.s32.totalorder %s9, 1
    %p68 = por %p66, %p67
    %p69 = scmp.ne.s32.totalorder %s61, %s64
    %p70 = scmp.eq.s32.totalorder %s9, 0
    %p71 = por %p69, %p70
    %p72 = scmp.ne.s32.totalorder %s61, %s64
    %p73 = scmp.eq.s32.totalorder %s14, 1
    %p74 = por %p72, %p73
    %p75 = scmp.ne.s32.totalorder %s64, %s65
    %p76 = scmp.eq.s32.totalorder %s14, 0
    %p77 = por %p75, %p76
    %p78 = scmp.ne.s32.totalorder %s64, %s65
    %p79 = scmp.eq.s32.totalorder %s15, 1
    %p80 = por %p78, %p79
    %p82 = scmp.ne.s32.totalorder %s65, %s81
    %p83 = scmp.eq.s32.totalorder %s15, 0
    %p84 = por %p82, %p83
    %s85 = ssub.s32 %s16, %s28
    %s86 = ssub.s32 %s17, %s24
    %s87 = sor.u32 %s85, %s86
    %p88 = scmp.eq.s32.totalorder %s87, 0
    %s90 = sadd.s32 %s89, 1
    %s91 = scalar_select %p88, %s89, %s90
    %p94 = pneg %p88
    %p95 = scmp.eq.s32.totalorder %s9, 1
    %p96 = por %p94, %p95
    %p97 = scmp.ne.s32.totalorder %s89, %s92
    %p98 = scmp.eq.s32.totalorder %s9, 0
    %p99 = por %p97, %p98
    %p100 = scmp.ne.s32.totalorder %s89, %s92
    %p101 = scmp.eq.s32.totalorder %s14, 1
    %p102 = por %p100, %p101
    %p103 = scmp.ne.s32.totalorder %s92, %s93
    %p104 = scmp.eq.s32.totalorder %s14, 0
    %p105 = por %p103, %p104
    %p106 = scmp.ne.s32.totalorder %s92, %s93
    %p107 = scmp.eq.s32.totalorder %s15, 1
    %p108 = por %p106, %p107
    %p110 = scmp.ne.s32.totalorder %s93, %s109
    %p111 = scmp.eq.s32.totalorder %s15, 0
    %p112 = por %p110, %p111
    %p113 = scmp.le.s32.totalorder 1, %s9
    %p114 = scmp.lt.s32.totalorder %s9, 3
    %p115 = pnand %p113, %p114
    %p116 = pneg %p115
    // Predicated region
    $region9: #{series_decomp.1} parent=5 // pred_check
      _
    $region10: #{series_decomp.1} parent=5 // pred_check_branch
      %118 = sbr.rel (%p115) target = $region12
    $region11: #{series_decomp.1} parent=5 // pred_region
      %s119 = ssub.s32 %s9, 1
    $region12: #{series_decomp.1} parent=5 // pred_fallthru
      _
    %p120 = scmp.lt.s32.totalorder %s9, 2
    // Predicated region
    $region13: #{series_decomp.1} parent=5 // pred_check
      %p121 = pneg %p120
    $region14: #{series_decomp.1} parent=5 // pred_check_branch
      %123 = sbr.rel (%p121) target = $region16
    $region15: #{series_decomp.1} parent=5 // pred_region
      // Predicated region
      $region17: #{series_decomp.1} parent=15 // pred_check
        %p124 = pneg %p43
      $region18: #{series_decomp.1} parent=15 // pred_check_branch
        %126 = sbr.rel (%p124) target = $region20
      $region19: #{series_decomp.1} parent=15 // pred_region
        %p127 = scmp.lt.s32.totalorder %s16, 1
        %s128 = scalar_select %p127, %s16, 1
        %p129 = scmp.lt.s32.totalorder %s17, 0
        %s130 = scalar_select %p129, %s17, 0
        %s131 = smul.addr %s128, 2
        %s132 = sadd.s32 %s130, %s131
        %s133 = smul.addr %s132, 8
        %s134 = scalar_lea.vmem %s0, %s133
      $region20: #{series_decomp.1} parent=15 // pred_fallthru
        _
    $region16: #{series_decomp.1} parent=5 // pred_fallthru
      _
    %p135 = scmp.le.s32.totalorder 1, %s9
    %p136 = scmp.lt.s32.totalorder %s9, 3
    %p137 = pnand %p135, %p136
    %p138 = pneg %p137
    // Predicated region
    $region21: #{series_decomp.1} parent=5 // pred_check
      _
    $region22: #{series_decomp.1} parent=5 // pred_check_branch
      %140 = sbr.rel (%p137) target = $region24
    $region23: #{series_decomp.1} parent=5 // pred_region
      %s141 = ssub.s32 %s9, 1
      %p142 = scmp.lt.s32.totalorder %s18, 1
      %s143 = scalar_select %p142, %s18, 1
      %p144 = scmp.lt.s32.totalorder %s19, 0
      %s145 = scalar_select %p144, %s19, 0
      %s146 = smul.addr %s143, 2
      %s147 = sadd.s32 %s145, %s146
      %s148 = smul.addr %s147, 8
      %s149 = scalar_lea.vmem %s0, %s148
      %p150 = pneg %p49
      %p151 = pneg %p46
      %p152 = pneg %p77
      %p153 = pneg %p74
      %p154 = scmp.lt.s32.totalorder %s18, 1
      %s155 = scalar_select %p154, %s18, 1
      %p156 = scmp.lt.s32.totalorder %s19, 0
      %s157 = scalar_select %p156, %s19, 0
      %s158 = smul.addr %s155, 2
      %s159 = sadd.s32 %s157, %s158
      %s160 = smul.addr %s159, 8
      %s161 = scalar_lea.vmem %s1, %s160
      %p162 = pneg %p105
      %p163 = pneg %p102
      %p164 = scmp.lt.s32.totalorder %s18, 1
      %s165 = scalar_select %p164, %s18, 1
      %p166 = scmp.lt.s32.totalorder %s19, 0
      %s167 = scalar_select %p166, %s19, 0
      %s168 = smul.addr %s165, 2
      %s169 = sadd.s32 %s167, %s168
      %s170 = smul.addr %s169, 8
      %s171 = scalar_lea.vmem %s2, %s170
      %p172 = scmp.lt.s32.totalorder %s18, 1
      %s173 = scalar_select %p172, %s18, 1
      %p174 = scmp.lt.s32.totalorder %s19, 0
      %s175 = scalar_select %p174, %s19, 0
      %s176 = smul.addr %s173, 2
      %s177 = sadd.s32 %s175, %s176
      %s178 = smul.addr %s177, 8
      %s179 = scalar_lea.vmem %s0, %s178
      %p180 = scmp.lt.s32.totalorder %s18, 1
      %s181 = scalar_select %p180, %s18, 1
      %p182 = scmp.lt.s32.totalorder %s19, 0
      %s183 = scalar_select %p182, %s19, 0
      %s184 = smul.addr %s181, 2
      %s185 = sadd.s32 %s183, %s184
      %s186 = smul.addr %s185, 8
      %s187 = scalar_lea.vmem %s1, %s186
      %p188 = scmp.lt.s32.totalorder %s18, 1
      %s189 = scalar_select %p188, %s18, 1
      %p190 = scmp.lt.s32.totalorder %s19, 0
      %s191 = scalar_select %p190, %s19, 0
      %s192 = smul.addr %s189, 2
      %s193 = sadd.s32 %s191, %s192
      %s194 = smul.addr %s193, 8
      %s195 = scalar_lea.vmem %s2, %s194
      %v196 = vld [vmem:[%s179] sm:$0xff]
      %v197 = vld [vmem:[%s179 + $0x8] sm:$0xff]
      %vm198 = vcmask 64512
      %199 = vst.msk [vmem:[#allocation2 + $0x8] sm:$0xff] %vm198, %v196
      %200 = vst.msk [vmem:[#allocation2 + $0x10] sm:$0xff] %vm198, %v197
      %v201 = vperm.slane %v196, 0
      %202 = vst.msk [vmem:[#allocation2] sm:$0xff] %vm198, %v201
      %v203 = vperm.slane %v197, 7
      %vm204 = vcmask 58368
      %205 = vst.msk [vmem:[#allocation2 + $0x18] sm:$0x3] %vm204, %v203
      %v206 = vld [vmem:[#allocation2 + $0x6] sm:$0xff]
      %v207 = vld [vmem:[#allocation2 + $0xe] sm:$0xff]
      %v208 = vadd.f32 %v196, %v206
      %v209 = vadd.f32 %v197, %v207
      %v210 = vld [vmem:[#allocation2 + $0x7] sm:$0xff]
      %v211 = vld [vmem:[#allocation2 + $0xf] sm:$0xff]
      %v212 = vadd.f32 %v208, %v210
      %v213 = vadd.f32 %v209, %v211
      %v214 = vld [vmem:[#allocation2 + $0x9] sm:$0xff]
      %v215 = vld [vmem:[#allocation2 + $0x11] sm:$0xff]
      %v216 = vadd.f32 %v212, %v214
      %v217 = vadd.f32 %v213, %v215
      %v218 = vld [vmem:[#allocation2 + $0xa] sm:$0xff]
      %v219 = vld [vmem:[#allocation2 + $0x12] sm:$0xff]
      %v220 = vadd.f32 %v216, %v218
      %v221 = vadd.f32 %v217, %v219
      %v222 = vmul.f32 %v220, 0.2
      %v223 = vmul.f32 %v221, 0.2
      %224 = vst.msk [vmem:[%s195] sm:$0xff] %vm198, %v222
      %225 = vst.msk [vmem:[%s195 + $0x8] sm:$0xff] %vm198, %v223
      %v226 = vsub.f32 %v196, %v222
      %v227 = vsub.f32 %v197, %v223
      %228 = vst.msk [vmem:[%s187] sm:$0xff] %vm198, %v226
      %229 = vst.msk [vmem:[%s187 + $0x8] sm:$0xff] %vm198, %v227
      %p230 = scmp.lt.s32.totalorder %s18, 1
      %s231 = scalar_select %p230, %s18, 1
      %p232 = scmp.lt.s32.totalorder %s19, 0
      %s233 = scalar_select %p232, %s19, 0
      %s234 = smul.addr %s231, 2
      %s235 = sadd.s32 %s233, %s234
      %s236 = smul.addr %s235, 8
      %s237 = scalar_lea.vmem %s1, %s236
      %p238 = scmp.lt.s32.totalorder %s18, 1
      %s239 = scalar_select %p238, %s18, 1
      %p240 = scmp.lt.s32.totalorder %s19, 0
      %s241 = scalar_select %p240, %s19, 0
      %s242 = smul.addr %s239, 2
      %s243 = sadd.s32 %s241, %s242
      %s244 = smul.addr %s243, 8
      %s245 = scalar_lea.vmem %s2, %s244
      // Predicated region
      $region25: #{series_decomp.1} parent=23 // pred_check
        %p246 = pneg %p74
      $region26: #{series_decomp.1} parent=23 // pred_check_branch
        %248 = sbr.rel (%p246) target = $region28
      $region27: #{series_decomp.1} parent=23 // pred_region
        _
      $region28: #{series_decomp.1} parent=23 // pred_fallthru
        _
      // Predicated region
      $region29: #{series_decomp.1} parent=23 // pred_check
        %p249 = pneg %p102
      $region30: #{series_decomp.1} parent=23 // pred_check_branch
        %251 = sbr.rel (%p249) target = $region32
      $region31: #{series_decomp.1} parent=23 // pred_region
        _
      $region32: #{series_decomp.1} parent=23 // pred_fallthru
        _
    $region24: #{series_decomp.1} parent=5 // pred_fallthru
      _
    %p252 = scmp.le.s32.totalorder 2, %s9
    // Predicated region
    $region33: #{series_decomp.1} parent=5 // pred_check
      %p253 = pneg %p252
    $region34: #{series_decomp.1} parent=5 // pred_check_branch
      %255 = sbr.rel (%p253) target = $region36
    $region35: #{series_decomp.1} parent=5 // pred_region
      %s256 = ssub.s32 %s9, 2
      // Predicated region
      $region37: #{series_decomp.1} parent=35 // pred_check
        %p257 = pneg %p80
      $region38: #{series_decomp.1} parent=35 // pred_check_branch
        %259 = sbr.rel (%p257) target = $region40
      $region39: #{series_decomp.1} parent=35 // pred_region
        %p260 = scmp.lt.s32.totalorder %s20, 1
        %s261 = scalar_select %p260, %s20, 1
        %p262 = scmp.lt.s32.totalorder %s21, 0
        %s263 = scalar_select %p262, %s21, 0
        %s264 = smul.addr %s261, 2
        %s265 = sadd.s32 %s263, %s264
        %s266 = smul.addr %s265, 8
        %s267 = scalar_lea.vmem %s1, %s266
      $region40: #{series_decomp.1} parent=35 // pred_fallthru
        _
      // Predicated region
      $region41: #{series_decomp.1} parent=35 // pred_check
        %p268 = pneg %p108
      $region42: #{series_decomp.1} parent=35 // pred_check_branch
        %270 = sbr.rel (%p268) target = $region44
      $region43: #{series_decomp.1} parent=35 // pred_region
        %p271 = scmp.lt.s32.totalorder %s20, 1
        %s272 = scalar_select %p271, %s20, 1
        %p273 = scmp.lt.s32.totalorder %s21, 0
        %s274 = scalar_select %p273, %s21, 0
        %s275 = smul.addr %s272, 2
        %s276 = sadd.s32 %s274, %s275
        %s277 = smul.addr %s276, 8
        %s278 = scalar_lea.vmem %s2, %s277
      $region44: #{series_decomp.1} parent=35 // pred_fallthru
        _
    $region36: #{series_decomp.1} parent=5 // pred_fallthru
      _
  $region6: #{series_decomp.1} parent=0 // loop_footer
    %s13 = sadd.s32 1, %s9
  $region7: #{series_decomp.1} parent=0 // loop_footer_branch
    %8 = sbr.rel target = $region3
  $region8: #{series_decomp.1} parent=0 // loop_exit
    _

</llo_original>
